<compile_context>
chip_gen: v7x
topology: tpu7x:2x2x1
jax: 0.10.0
libtpu: 0.0.40
codegen_flags: <defaults>
</compile_context>

<pallas_src>
import functools

import jax
import jax.numpy as jnp
from jax.experimental import pallas as pl
from jax.experimental.pallas import tpu as pltpu


def _round_up(x, m):
    return (x + m - 1) // m * m


# --------------------------- kernel 1: gather + mean pool ---------------------------
def _pool_kernel(tok_ref, cnt_ref, emb_row_ref, pooled_ref, acc_ref):
    # Grid: (b, t) = (bag index, slot within bag).
    #   tok_ref : (B_pad, T_max) int32 SMEM  -- token id for (bag, slot)
    #   cnt_ref : (B_pad,)       int32 SMEM  -- bag length
    #   emb_row_ref : (1, 1, D_pad) bf16     -- gathered embedding row (data-dependent index_map)
    #   pooled_ref  : (1, 1, D_pad) f32      -- output: running mean for this bag
    #   acc_ref     : (1, 1, D_pad) f32 VMEM -- scratch accumulator (sum of valid rows)
    b = pl.program_id(0)
    t = pl.program_id(1)
    cnt = cnt_ref[b]

    @pl.when(t == 0)
    def _init():
        acc_ref[...] = jnp.zeros_like(acc_ref)

    # Unconditional accumulate; invalid slots contribute 0 (their DMA'd row is ignored).
    valid = (t < cnt).astype(jnp.float32)
    acc_ref[...] += valid * emb_row_ref[...].astype(jnp.float32)

    # Write the output block every step (canonical pattern); the last write is the mean.
    inv_cnt = 1.0 / jnp.maximum(cnt, 1).astype(jnp.float32)   # empty bag -> zeros (PyTorch)
    pooled_ref[...] = acc_ref[...] * inv_cnt


# --------------------------- kernel 2: linear + softmax -----------------------------
def _head_kernel(pooled_ref, w_ref, bias_ref, out_ref, *, num_classes):
    #   pooled_ref : (B_pad, D_pad) f32
    #   w_ref      : (D_pad, C_pad) bf16   -- fc weight, transposed + zero-padded
    #   bias_ref   : (1, C_pad) f32        -- fc bias, zero-padded
    #   out_ref    : (B_pad, C_pad) f32    -- class probabilities
    x = pooled_ref[...].astype(jnp.bfloat16)
    logits = jnp.dot(x, w_ref[...], preferred_element_type=jnp.float32) + bias_ref[...]
    # Mask out padded class columns so they don't pollute the softmax.
    col = jax.lax.broadcasted_iota(jnp.int32, logits.shape, dimension=1)
    logits = jnp.where(col < num_classes, logits, jnp.full_like(logits, -1e30))
    m = jnp.max(logits, axis=-1, keepdims=True)
    e = jnp.exp(logits - m)
    out_ref[...] = e / jnp.sum(e, axis=-1, keepdims=True)


# --------------------------------- wrapper ------------------------------------------
def text_classifier_forward(text, offsets, emb_table, fc_w, fc_b):
    """text: (L,) int token ids, offsets: (B,) sorted bag start positions.

    emb_table: (V, D) f32, fc_w: (C, D) f32 (PyTorch layout), fc_b: (C,) f32.
    Returns (B, C) f32 class probabilities.
    NOTE: the grid extent T_max (max bag length) must be static, so `offsets` must be
    concrete here (eager call / static arg under jit).
    """
    L = int(text.shape[0])
    B = int(offsets.shape[0])
    V, D = emb_table.shape
    C = fc_w.shape[0]

    D_pad = _round_up(max(D, 1), 128)
    C_pad = _round_up(max(C, 1), 128)
    B_pad = _round_up(max(B, 1), 8)

    offsets = offsets.astype(jnp.int32)
    text_i32 = text.astype(jnp.int32)

    # --- per-bag token schedule (tiny index glue) ------------------------------------
    ends = jnp.concatenate([offsets[1:], jnp.array([L], dtype=jnp.int32)])
    counts = (ends - offsets).astype(jnp.int32)                 # (B,)
    T_max = max(int(jnp.max(counts)), 1)                        # static grid extent

    slot = jnp.arange(T_max, dtype=jnp.int32)[None, :]          # (1, T_max)
    valid = slot < counts[:, None]                              # (B, T_max)
    tok_pos = jnp.clip(offsets[:, None] + slot, 0, L - 1)       # (B, T_max)
    ids = jnp.clip(text_i32[tok_pos], 0, V - 1)                 # clamp: no OOB DMA index
    tok_tbl = jnp.where(valid, ids, 0).astype(jnp.int32)        # (B, T_max)

    if B_pad > B:                                               # pad bags with count 0
        tok_tbl = jnp.pad(tok_tbl, ((0, B_pad - B), (0, 0)))
        counts = jnp.pad(counts, (0, B_pad - B))

    # --- padded / quantized parameters -----------------------------------------------
    emb_p = jnp.zeros((V, 1, D_pad), jnp.bfloat16)
    emb_p = emb_p.at[:, 0, :D].set(emb_table.astype(jnp.bfloat16))   # stays in HBM, gathered by row
    w_p = jnp.zeros((D_pad, C_pad), jnp.bfloat16)
    w_p = w_p.at[:D, :C].set(fc_w.T.astype(jnp.bfloat16))
    b_p = jnp.zeros((1, C_pad), jnp.float32)
    b_p = b_p.at[0, :C].set(fc_b.astype(jnp.float32))

    # --- kernel 1: per-bag mean pooling via row gather --------------------------------
    pooled = pl.pallas_call(
        _pool_kernel,
        out_shape=jax.ShapeDtypeStruct((B_pad, 1, D_pad), jnp.float32),
        grid_spec=pltpu.PrefetchScalarGridSpec(
            num_scalar_prefetch=2,                 # tok_tbl, counts -> SMEM
            grid=(B_pad, T_max),
            in_specs=[
                # Row gather: leading-dim block index comes from the SMEM token table.
                pl.BlockSpec((1, 1, D_pad), lambda b, t, tok, cnt: (tok[b, t], 0, 0)),
            ],
            out_specs=pl.BlockSpec((1, 1, D_pad), lambda b, t, tok, cnt: (b, 0, 0)),
            scratch_shapes=[pltpu.VMEM((1, 1, D_pad), jnp.float32)],
        ),
        compiler_params=pltpu.CompilerParams(
            dimension_semantics=("parallel", "arbitrary")),
    )(tok_tbl, counts, emb_p)

    pooled2d = pooled.reshape(B_pad, D_pad)

    # --- kernel 2: Linear + Softmax over all bags at once ------------------------------
    probs_pad = pl.pallas_call(
        functools.partial(_head_kernel, num_classes=C),
        out_shape=jax.ShapeDtypeStruct((B_pad, C_pad), jnp.float32),
        grid=(1,),
        in_specs=[
            pl.BlockSpec((B_pad, D_pad), lambda i: (0, 0)),
            pl.BlockSpec((D_pad, C_pad), lambda i: (0, 0)),
            pl.BlockSpec((1, C_pad), lambda i: (0, 0)),
        ],
        out_specs=pl.BlockSpec((B_pad, C_pad), lambda i: (0, 0)),
    )(pooled2d, w_p, b_p)

    return probs_pad[:B, :C]


# ------------------------------ references ------------------------------------------
def _reference_f32(text, offsets, emb_table, fc_w, fc_b):
    """Pure-f32 EmbeddingBag(mean) + Linear + Softmax (PyTorch semantics)."""
    L = text.shape[0]
    ends = jnp.concatenate([offsets[1:], jnp.array([L], dtype=offsets.dtype)])
    pos = jnp.arange(L, dtype=offsets.dtype)
    mask = (pos[None, :] >= offsets[:, None]) & (pos[None, :] < ends[:, None])
    gathered = emb_table[text]
    counts = jnp.maximum(mask.sum(axis=1), 1).astype(jnp.float32)
    embedded = (mask.astype(jnp.float32) @ gathered) / counts[:, None]
    logits = embedded @ fc_w.T + fc_b
    return jax.nn.softmax(logits, axis=1)


def _reference_bf16(text, offsets, emb_table, fc_w, fc_b):
    """Mirrors the kernel's bf16-quantized matmul inputs (f32 accumulation)."""
    emb_q = emb_table.astype(jnp.bfloat16).astype(jnp.float32)
    w_q = fc_w.astype(jnp.bfloat16).astype(jnp.float32)
    L = text.shape[0]
    ends = jnp.concatenate([offsets[1:], jnp.array([L], dtype=offsets.dtype)])
    pos = jnp.arange(L, dtype=offsets.dtype)
    mask = (pos[None, :] >= offsets[:, None]) & (pos[None, :] < ends[:, None])
    gathered = emb_q[text]
    counts = jnp.maximum(mask.sum(axis=1), 1).astype(jnp.float32)
    embedded = (mask.astype(jnp.float32) @ gathered) * (1.0 / counts)[:, None]
    embedded = embedded.astype(jnp.bfloat16).astype(jnp.float32)
    logits = embedded @ w_q.T + fc_b
    return jax.nn.softmax(logits, axis=1)


if __name__ == "__main__":
    # Small, deterministic synthetic setup.
    vocab_size, emb_dim, num_classes = 50, 32, 5
    batch = 4
    total_tokens = 20

    key = jax.random.PRNGKey(0)
    k_emb, k_w, k_b, k_txt = jax.random.split(key, 4)

    emb_table = jax.random.normal(k_emb, (vocab_size, emb_dim), dtype=jnp.float32)
    fc_w = jax.random.normal(k_w, (num_classes, emb_dim), dtype=jnp.float32) * 0.1
    fc_b = jax.random.normal(k_b, (num_classes,), dtype=jnp.float32) * 0.1

    text = jax.random.randint(k_txt, (total_tokens,), 0, vocab_size, dtype=jnp.int32)
    offsets = jnp.array([0, 5, 9, 14], dtype=jnp.int32)   # 4 non-empty bags

    probs = text_classifier_forward(text, offsets, emb_table, fc_w, fc_b)
    probs = jax.block_until_ready(probs)

    assert probs.shape == (batch, num_classes)
    # Rows must be valid probability distributions.
    assert jnp.allclose(probs.sum(axis=1), 1.0, atol=1e-3), probs.sum(axis=1)
    # Check vs a reference that mirrors the kernel's bf16 matmul inputs.
    ref_q = _reference_bf16(text, offsets, emb_table, fc_w, fc_b)
    assert jnp.allclose(probs, ref_q, atol=3e-3, rtol=3e-3), (probs, ref_q)
    # Looser check vs the exact f32 PyTorch-semantics reference.
    ref_f32 = _reference_f32(text, offsets, emb_table, fc_w, fc_b)
    assert jnp.allclose(probs, ref_f32, atol=3e-2, rtol=3e-2), (probs, ref_f32)
    print("KERNEL_OK")
</pallas_src>

<mosaic_0001>
module attributes {stable_mosaic.version = 11 : i64} {
  func.func @_pool_kernel(%arg0: i32, %arg1: i32, %arg2: memref<8x6xi32, #tpu.memory_space<smem>>, %arg3: memref<8xi32, #tpu.memory_space<smem>>, %arg4: memref<1x1x128xbf16, #tpu.memory_space<vmem>>, %arg5: memref<1x1x128xf32, #tpu.memory_space<vmem>>, %arg6: memref<1x1x128xf32, #tpu.memory_space<vmem>>) attributes {dimension_semantics = [#tpu.dimension_semantics<parallel>, #tpu.dimension_semantics<arbitrary>], iteration_bounds = array<i64: 8, 6>, scalar_prefetch = 2 : i64, scratch_operands = 1 : i64, tpu.core_type = #tpu.core_type<tc>, window_params = [{transform_indices = @transform_0, window_bounds = array<i64: 1, 1, 128>}, {transform_indices = @transform_1, window_bounds = array<i64: 1, 1, 128>}]} {
    %0 = arith.index_cast %arg0 : i32 to index
    %1 = memref.load %arg3[%0] : memref<8xi32, #tpu.memory_space<smem>>
    %c0_i32 = arith.constant 0 : i32
    %2 = arith.cmpi eq, %arg1, %c0_i32 : i32
    %3 = arith.extui %2 : i1 to i32
    %c0_i32_0 = arith.constant 0 : i32
    %4 = arith.cmpi ne, %3, %c0_i32_0 : i32
    scf.if %4 {
      %cst_15 = arith.constant 0.000000e+00 : f32
      %22 = vector.broadcast %cst_15 : f32 to vector<1x1x128xf32>
      %c0_16 = arith.constant 0 : index
      %c0_17 = arith.constant 0 : index
      %c0_18 = arith.constant 0 : index
      %23 = vector.load %arg6[%c0_16, %c0_17, %c0_18] : memref<1x1x128xf32, #tpu.memory_space<vmem>>, vector<1x1x128xf32>
      tpu.vector_store %arg6[%c0_16, %c0_17, %c0_18], %22 {strides = array<i32>} : memref<1x1x128xf32, #tpu.memory_space<vmem>>, vector<1x1x128xf32>,
    } else {
    }
    %5 = arith.cmpi slt, %arg1, %1 : i32
    %6 = arith.extui %5 : i1 to i32
    %7 = arith.sitofp %6 : i32 to f32
    %c0 = arith.constant 0 : index
    %c0_1 = arith.constant 0 : index
    %c0_2 = arith.constant 0 : index
    %8 = vector.load %arg6[%c0, %c0_1, %c0_2] : memref<1x1x128xf32, #tpu.memory_space<vmem>>, vector<1x1x128xf32>
    %c0_3 = arith.constant 0 : index
    %c0_4 = arith.constant 0 : index
    %c0_5 = arith.constant 0 : index
    %9 = vector.load %arg4[%c0_3, %c0_4, %c0_5] : memref<1x1x128xbf16, #tpu.memory_space<vmem>>, vector<1x1x128xbf16>
    %10 = arith.extf %9 : vector<1x1x128xbf16> to vector<1x1x128xf32>
    %11 = vector.broadcast %7 : f32 to vector<1x1x128xf32>
    %12 = arith.mulf %11, %10 : vector<1x1x128xf32>
    %13 = arith.addf %8, %12 : vector<1x1x128xf32>
    %c0_6 = arith.constant 0 : index
    %c0_7 = arith.constant 0 : index
    %c0_8 = arith.constant 0 : index
    %14 = vector.load %arg6[%c0_6, %c0_7, %c0_8] : memref<1x1x128xf32, #tpu.memory_space<vmem>>, vector<1x1x128xf32>
    tpu.vector_store %arg6[%c0_6, %c0_7, %c0_8], %13 {strides = array<i32>} : memref<1x1x128xf32, #tpu.memory_space<vmem>>, vector<1x1x128xf32>,
    %c1_i32 = arith.constant 1 : i32
    %15 = arith.maxsi %1, %c1_i32 : i32
    %16 = arith.sitofp %15 : i32 to f32
    %cst = arith.constant 1.000000e+00 : f32
    %17 = arith.divf %cst, %16 : f32
    %c0_9 = arith.constant 0 : index
    %c0_10 = arith.constant 0 : index
    %c0_11 = arith.constant 0 : index
    %18 = vector.load %arg6[%c0_9, %c0_10, %c0_11] : memref<1x1x128xf32, #tpu.memory_space<vmem>>, vector<1x1x128xf32>
    %19 = vector.broadcast %17 : f32 to vector<1x1x128xf32>
    %20 = arith.mulf %18, %19 : vector<1x1x128xf32>
    %c0_12 = arith.constant 0 : index
    %c0_13 = arith.constant 0 : index
    %c0_14 = arith.constant 0 : index
    %21 = vector.load %arg5[%c0_12, %c0_13, %c0_14] : memref<1x1x128xf32, #tpu.memory_space<vmem>>, vector<1x1x128xf32>
    tpu.vector_store %arg5[%c0_12, %c0_13, %c0_14], %20 {strides = array<i32>} : memref<1x1x128xf32, #tpu.memory_space<vmem>>, vector<1x1x128xf32>,
    return
  }
  func.func @transform_0(%arg0: i32, %arg1: i32, %arg2: memref<8x6xi32, #tpu.memory_space<smem>>, %arg3: memref<8xi32, #tpu.memory_space<smem>>) -> (i32, i32, i32) {
    %0 = arith.index_cast %arg0 : i32 to index
    %1 = arith.index_cast %arg1 : i32 to index
    %2 = memref.load %arg2[%0, %1] : memref<8x6xi32, #tpu.memory_space<smem>>
    %c0_i32 = arith.constant 0 : i32
    %c0_i32_0 = arith.constant 0 : i32
    %c0_i32_1 = arith.constant 0 : i32
    return %2, %c0_i32, %c0_i32_0 : i32, i32, i32
  }
  func.func @transform_1(%arg0: i32, %arg1: i32, %arg2: memref<8x6xi32, #tpu.memory_space<smem>>, %arg3: memref<8xi32, #tpu.memory_space<smem>>) -> (i32, i32, i32) {
    %c0_i32 = arith.constant 0 : i32
    %c0_i32_0 = arith.constant 0 : i32
    %c0_i32_1 = arith.constant 0 : i32
    return %arg0, %c0_i32, %c0_i32_0 : i32, i32, i32
  }
}

</mosaic_0001>

<llo_original>
// kernel: tpu_custom_call.1
$region0: #{tpu_custom_call.1}
  #allocation0 [shape = 'u32[]', space=smem, size = 0x4, offset = 0x4, fixed_abs, tag = 'smem constant byte address 0x4 - core index']
  #allocation1 [shape = 'u32[144,128]{1,0:T(1,128)}', space=vmem, size = 0x12000, scoped, tag = 'internal scratch']
  #allocation2 [shape = 'f32[1,1,128]{2,1,0:T(1,128)}', space=vmem, size = 0x200, scoped, tag = 'scratch operand']
  #allocation3 [shape = 's32[1]{0}', space=sflag, size = 0x4, scoped, tag = 'scoped memory for tpu_custom_call.1']
  #allocation4 [shape = 'u8[4096]{0}', space=smem, size = 0x1000, scoped, tag = 'prefetched SMEM operand 0']
  #allocation5 [shape = 'u8[512]{0}', space=smem, size = 0x200, scoped, tag = 'prefetched SMEM operand 1']
  %s0 = inlined_call_operand.vmem [shape: s32[8,6], index: 0, kind: input, shape index: {}]
  %s1 = inlined_call_operand.vmem [shape: s32[8], index: 1, kind: input, shape index: {}]
  %s2 = inlined_call_operand.vmem [shape: bf16[50,1,128], index: 2, kind: input, shape index: {}]
  %s3 = inlined_call_operand.hbm [shape: f32[8,1,128], index: 3, kind: output, shape index: {}]
  %s4 = sld [smem:[#allocation0]]
  $region41: #{tpu_custom_call.1} parent=0
    _
  %s6 = ssub.s32 1, %s4
  %s7 = scalar_select 0, %s6, %s4
  %s8 = sshll.u32 %s0, 4
  %s9 = int_to_ptr.vmem [resolvable:$true] %s8
  %11 = dma.vmem_to_smem %s9, 128, [#allocation4], [#allocation3]
  %s12 = sshll.u32 %s1, 4
  %s13 = int_to_ptr.vmem [resolvable:$true] %s12
  %15 = dma.vmem_to_smem %s13, 16, [#allocation5], [#allocation3]
  %16 = dma.done [#allocation3], 144
  %17 = sfence
  $region1: #{tpu_custom_call.1} parent=0
    #allocation6 [shape = 'u8[1024]{0}', space=vmem, size = 0x400, scoped, tag = 'output window, operand 0']
    #allocation7 [shape = 's32[2]{0}', space=sflag, size = 0x8, scoped, tag = 'scoped memory for tpu_custom_call.1']
    %18 = vsyncpa [#allocation7], 0
    %s19 = scalar_lea.sflag [#allocation7], 1
    %20 = vsyncpa %s19, 0
    loop: start=0, step=1, limit=50
    $region2: #{tpu_custom_call.1} parent=1 // loop_pre_header
      _
    $region3: #{tpu_custom_call.1} parent=1 // loop_header
      %s22 = sphi 0, %s26
      %p23 = scmp.ge.s32.totalorder %s22, 50
      %s29 = sphi 0, %s41
      %s30 = sphi 0, %s37
      %s31 = sphi 0, %s29
      %s32 = sphi 0, %s30
      %s33 = sphi 0, %s31
      %s34 = sphi 0, %s32
      %s60 = sphi 0, %s62
      %s63 = sphi 0, %s60
      %s64 = sphi 0, %s63
      %s80 = sphi 0, %s64
      %s86 = sphi 0, %s88
      %s89 = sphi 0, %s86
      %s90 = sphi 0, %s89
      %s106 = sphi 0, %s90
    $region4: #{tpu_custom_call.1} parent=1 // loop_header_branch
      %25 = sbr.rel (%p23) target = $region8
    $region5: #{tpu_custom_call.1} parent=1 // loop_body
      %s27 = ssub.s32 %s22, 1
      %s28 = ssub.s32 %s22, 2
      %s35 = sadd.s32 1, %s30
      %p36 = scmp.ge.s32.totalorder %s35, 6
      %s37 = scalar_select %p36, 0, %s35
      %s38 = sadd.s32 1, %s29
      %s39 = scalar_select %p36, %s38, %s29
      %p40 = scmp.ge.s32.totalorder %s39, 8
      %s41 = scalar_select %p40, 0, %s39
      %s42 = sshra.s32 %s30, 7
      %s43 = sand.u32 %s30, 127
      %s44 = sadd.s32 %s42, %s29
      %s45 = smul.u32 %s44, 128
      %s46 = sshra.s32 %s30, 7
      %s47 = sand.u32 %s30, 127
      %s48 = sadd.s32 %s45, %s47
      %s49 = sld [smem:[#allocation4 + %s48]]
      %s50 = sshra.s32 %s37, 7
      %s51 = sand.u32 %s37, 127
      %s52 = sadd.s32 %s50, %s41
      %s53 = smul.u32 %s52, 128
      %s54 = sshra.s32 %s37, 7
      %s55 = sand.u32 %s37, 127
      %s56 = sadd.s32 %s53, %s55
      %s57 = sld [smem:[#allocation4 + %s56]]
      %s58 = ssub.s32 %s49, %s57
      %p59 = scmp.eq.s32.totalorder %s58, 0
      %s61 = sadd.s32 %s60, 1
      %s62 = scalar_select %p59, %s60, %s61
      %p65 = pneg %p59
      %p66 = scmp.eq.s32.totalorder %s22, 47
      %p67 = por %p65, %p66
      %p68 = scmp.ne.s32.totalorder %s60, %s63
      %p69 = scmp.eq.s32.totalorder %s22, 0
      %p70 = por %p68, %p69
      %p71 = scmp.ne.s32.totalorder %s60, %s63
      %p72 = scmp.eq.s32.totalorder %s27, 47
      %p73 = por %p71, %p72
      %p74 = scmp.ne.s32.totalorder %s63, %s64
      %p75 = scmp.eq.s32.totalorder %s27, 0
      %p76 = por %p74, %p75
      %p77 = scmp.ne.s32.totalorder %s63, %s64
      %p78 = scmp.eq.s32.totalorder %s28, 47
      %p79 = por %p77, %p78
      %p81 = scmp.ne.s32.totalorder %s64, %s80
      %p82 = scmp.eq.s32.totalorder %s28, 0
      %p83 = por %p81, %p82
      %s84 = ssub.s32 %s29, %s41
      %p85 = scmp.eq.s32.totalorder %s84, 0
      %s87 = sadd.s32 %s86, 1
      %s88 = scalar_select %p85, %s86, %s87
      %p91 = pneg %p85
      %p92 = scmp.eq.s32.totalorder %s22, 47
      %p93 = por %p91, %p92
      %p94 = scmp.ne.s32.totalorder %s86, %s89
      %p95 = scmp.eq.s32.totalorder %s22, 0
      %p96 = por %p94, %p95
      %p97 = scmp.ne.s32.totalorder %s86, %s89
      %p98 = scmp.eq.s32.totalorder %s27, 47
      %p99 = por %p97, %p98
      %p100 = scmp.ne.s32.totalorder %s89, %s90
      %p101 = scmp.eq.s32.totalorder %s27, 0
      %p102 = por %p100, %p101
      %p103 = scmp.ne.s32.totalorder %s89, %s90
      %p104 = scmp.eq.s32.totalorder %s28, 47
      %p105 = por %p103, %p104
      %p107 = scmp.ne.s32.totalorder %s90, %s106
      %p108 = scmp.eq.s32.totalorder %s28, 0
      %p109 = por %p107, %p108
      %p110 = scmp.le.s32.totalorder 1, %s22
      %p111 = scmp.lt.s32.totalorder %s22, 49
      %p112 = pnand %p110, %p111
      %p113 = pneg %p112
      // Predicated region
      $region9: #{tpu_custom_call.1} parent=5 // pred_check
        _
      $region10: #{tpu_custom_call.1} parent=5 // pred_check_branch
        %115 = sbr.rel (%p112) target = $region12
      $region11: #{tpu_custom_call.1} parent=5 // pred_region
        %s116 = ssub.s32 %s22, 1
      $region12: #{tpu_custom_call.1} parent=5 // pred_fallthru
        _
      %p117 = scmp.lt.s32.totalorder %s22, 48
      // Predicated region
      $region13: #{tpu_custom_call.1} parent=5 // pred_check
        %p118 = pneg %p117
      $region14: #{tpu_custom_call.1} parent=5 // pred_check_branch
        %120 = sbr.rel (%p118) target = $region16
      $region15: #{tpu_custom_call.1} parent=5 // pred_region
        // Predicated region
        $region17: #{tpu_custom_call.1} parent=15 // pred_check
          %p121 = pneg %p70
        $region18: #{tpu_custom_call.1} parent=15 // pred_check_branch
          %123 = sbr.rel (%p121) target = $region20
        $region19: #{tpu_custom_call.1} parent=15 // pred_region
          %s124 = sshra.s32 %s30, 7
          %s125 = sand.u32 %s30, 127
          %s126 = sadd.s32 %s124, %s29
          %s127 = smul.u32 %s126, 128
          %s128 = sshra.s32 %s30, 7
          %s129 = sand.u32 %s30, 127
          %s130 = sadd.s32 %s127, %s129
          %s131 = sld [smem:[#allocation4 + %s130]]
          %p132 = scmp.lt.s32.totalorder %s131, 49
          %s133 = scalar_select %p132, %s131, 49
          %s134 = scalar_lea.vmem %s2, %s133
          %s135 = sshra.s32 %s30, 7
          %s136 = sand.u32 %s30, 127
          %s137 = sadd.s32 %s135, %s29
          %s138 = smul.u32 %s137, 128
          %s139 = sshra.s32 %s30, 7
          %s140 = sand.u32 %s30, 127
          %s141 = sadd.s32 %s138, %s140
          %s142 = sld [smem:[#allocation4 + %s141]]
        $region20: #{tpu_custom_call.1} parent=15 // pred_fallthru
          _
      $region16: #{tpu_custom_call.1} parent=5 // pred_fallthru
        _
      %p143 = scmp.le.s32.totalorder 1, %s22
      %p144 = scmp.lt.s32.totalorder %s22, 49
      %p145 = pnand %p143, %p144
      %p146 = pneg %p145
      // Predicated region
      $region21: #{tpu_custom_call.1} parent=5 // pred_check
        _
      $region22: #{tpu_custom_call.1} parent=5 // pred_check_branch
        %148 = sbr.rel (%p145) target = $region24
      $region23: #{tpu_custom_call.1} parent=5 // pred_region
        %s149 = ssub.s32 %s22, 1
        %s150 = sshra.s32 %s32, 7
        %s151 = sand.u32 %s32, 127
        %s152 = sadd.s32 %s150, %s31
        %s153 = smul.u32 %s152, 128
        %s154 = sshra.s32 %s32, 7
        %s155 = sand.u32 %s32, 127
        %s156 = sadd.s32 %s153, %s155
        %s157 = sld [smem:[#allocation4 + %s156]]
        %p158 = scmp.lt.s32.totalorder %s157, 49
        %s159 = scalar_select %p158, %s157, 49
        %s160 = scalar_lea.vmem %s2, %s159
        %p161 = pneg %p76
        %p162 = pneg %p73
        %p163 = pneg %p102
        %p164 = pneg %p99
        %s165 = sand.u32 %s89, 1
        %s166 = scalar_lea.sflag [#allocation7], %s165
        %s167 = sand.u32 %s89, 1
        %s168 = scalar_lea.vmem [#allocation6], %s167
        %s169 = sshra.s32 %s32, 7
        %s170 = sand.u32 %s32, 127
        %s171 = sadd.s32 %s169, %s31
        %s172 = smul.u32 %s171, 128
        %s173 = sshra.s32 %s32, 7
        %s174 = sand.u32 %s32, 127
        %s175 = sadd.s32 %s172, %s174
        %s176 = sld [smem:[#allocation4 + %s175]]
        %p177 = scmp.lt.s32.totalorder %s176, 49
        %s178 = scalar_select %p177, %s176, 49
        %s179 = scalar_lea.vmem %s2, %s178
        %s180 = sshra.s32 %s32, 7
        %s181 = sand.u32 %s32, 127
        %s182 = sadd.s32 %s180, %s31
        %s183 = smul.u32 %s182, 128
        %s184 = sshra.s32 %s32, 7
        %s185 = sand.u32 %s32, 127
        %s186 = sadd.s32 %s183, %s185
        %s187 = sld [smem:[#allocation4 + %s186]]
        %s188 = sld [smem:[#allocation5 + %s31]]
        %p189 = scmp.eq.s32.totalorder %s32, 0
        // Predicated region
        $region25: #{tpu_custom_call.1} parent=23 // pred_check
          %p190 = pneg %p189
        $region26: #{tpu_custom_call.1} parent=23 // pred_check_branch
          %192 = sbr.rel (%p190) target = $region28
        $region27: #{tpu_custom_call.1} parent=23 // pred_region
          %193 = vst [vmem:[#allocation2] sm:$0x1] 0.0
        $region28: #{tpu_custom_call.1} parent=23 // pred_fallthru
          _
        %p194 = scmp.lt.s32.totalorder %s32, %s188
        %s195 = scalar_select %p194, 1, 0
        %s196 = scvt.s32.f32 %s195
        %v197 = vld [vmem:[#allocation2] sm:$0x1]
        %v198 = vld [vmem:[%s179] sm:$0x1]
        %v199 = vunpack.c.l.bf16 %v198
        %v200 = vstv %s196
        %v201 = vmul.f32 %v200, %v199
        %v202 = vadd.f32 %v197, %v201
        %203 = vst [vmem:[#allocation2] sm:$0x1] %v202
        %p204 = scmp.gt.s32.totalorder %s188, 1
        %s205 = scalar_select %p204, %s188, 1
        %s206 = scvt.s32.f32 %s205
        %v207 = vstv %s206
        %v208 = vrcp.pop %v207
        %s209 = vtos %v208
        %v210 = vld [vmem:[#allocation2] sm:$0x1]
        %v211 = vstv %s209
        %v212 = vmul.f32 %v210, %v211
        %213 = vst [vmem:[%s168] sm:$0x1] %v212
        %s214 = sand.u32 %s89, 1
        %s215 = scalar_lea.sflag [#allocation7], %s214
        %s216 = sand.u32 %s89, 1
        %s217 = scalar_lea.vmem [#allocation6], %s216
        // Predicated region
        $region29: #{tpu_custom_call.1} parent=23 // pred_check
          %p218 = pneg %p99
        $region30: #{tpu_custom_call.1} parent=23 // pred_check_branch
          %220 = sbr.rel (%p218) target = $region32
        $region31: #{tpu_custom_call.1} parent=23 // pred_region
          %s222 = ssub.s32 16, 16
          %223 = vsyncadd %s215, %s222
          %s224 = smul.addr %s31, 16
          %s225 = scalar_lea.hbm %s3, %s224
          %s227 = sshll.u32 %s217, 4
          %s228 = int_to_ptr.vmem [resolvable:$true] %s227
          %230 = dma.vmem_to_hbm [thread:$0]  %s228, 16, %s225, %s215
        $region32: #{tpu_custom_call.1} parent=23 // pred_fallthru
          _
      $region24: #{tpu_custom_call.1} parent=5 // pred_fallthru
        _
      %p231 = scmp.le.s32.totalorder 2, %s22
      // Predicated region
      $region33: #{tpu_custom_call.1} parent=5 // pred_check
        %p232 = pneg %p231
      $region34: #{tpu_custom_call.1} parent=5 // pred_check_branch
        %234 = sbr.rel (%p232) target = $region36
      $region35: #{tpu_custom_call.1} parent=5 // pred_region
        %s235 = ssub.s32 %s22, 2
        // Predicated region
        $region37: #{tpu_custom_call.1} parent=35 // pred_check
          %p236 = pneg %p105
        $region38: #{tpu_custom_call.1} parent=35 // pred_check_branch
          %238 = sbr.rel (%p236) target = $region40
        $region39: #{tpu_custom_call.1} parent=35 // pred_region
          %s239 = sand.u32 %s90, 1
          %s240 = scalar_lea.sflag [#allocation7], %s239
          %s241 = sand.u32 %s90, 1
          %s242 = scalar_lea.vmem [#allocation6], %s241
          %243 = dma.done %s240, 16
        $region40: #{tpu_custom_call.1} parent=35 // pred_fallthru
          _
      $region36: #{tpu_custom_call.1} parent=5 // pred_fallthru
        _
    $region6: #{tpu_custom_call.1} parent=1 // loop_footer
      %s26 = sadd.s32 1, %s22
    $region7: #{tpu_custom_call.1} parent=1 // loop_footer_branch
      %21 = sbr.rel target = $region3
    $region8: #{tpu_custom_call.1} parent=1 // loop_exit
      _
    %244 = vsyncpa [#allocation7], 1
    %s245 = scalar_lea.sflag [#allocation7], 1
    %246 = vsyncpa %s245, 1

</llo_original>
